<compile_context>
chip_gen: v5e
topology: v5e:2x2
jax: 0.10.0
libtpu: 0.0.40
codegen_flags: <defaults>
</compile_context>

<pallas_src>
import functools

import jax
import jax.numpy as jnp
from jax import lax
from jax.experimental import pallas as pl
from jax.experimental.pallas import tpu as pltpu


def _infonce_kernel(img_ref, txt_ref, out_ref, *, inv_temperature, valid_b):
    img = img_ref[...].astype(jnp.float32)   # (Bp, Dp)
    txt = txt_ref[...].astype(jnp.float32)   # (Bp, Dp)
    b_pad = img.shape[0]

    # torch F.normalize(x, dim=-1):  x / max(||x||, 1e-12)
    #   == x * rsqrt(max(||x||^2, 1e-24))
    img_inv = lax.rsqrt(
        jnp.maximum(jnp.sum(img * img, axis=-1, keepdims=True), 1e-24))
    txt_inv = lax.rsqrt(
        jnp.maximum(jnp.sum(txt * txt, axis=-1, keepdims=True), 1e-24))

    # Fold 1/temperature into the (B, D) image operand: one multiply on the
    # small tensor instead of a divide on the (B, B) logits.
    img_s = img * (img_inv * inv_temperature)   # (Bp, Dp) — normalized & scaled
    txt_n = txt * txt_inv                       # (Bp, Dp) — normalized

    # Correct-pair logits straight from the (B, D) product (O(B*D), exact f32),
    # instead of building (B, B) iota masks and a masked row-reduce.
    diag = jnp.sum(img_s * txt_n, axis=-1, keepdims=True)   # (Bp, 1)

    # logits[i, j] = <img_n[i], txt_n[j]> / temperature
    logits = lax.dot_general(
        img_s, txt_n,
        dimension_numbers=(((1,), (1,)), ((), ())),
        preferred_element_type=jnp.float32,
    )                                                        # (Bp, Bp)
    # NOTE: for production shapes cast img_s/txt_n to bf16 here (keep
    # preferred_element_type=f32) for native MXU rate; skipped to hold the
    # 1e-5 f32 reference tolerance in this test.

    needs_mask = valid_b != b_pad   # static (trace-time) — no-op when B % 8 == 0
    if needs_mask:
        rvalid = lax.broadcasted_iota(jnp.int32, (b_pad, 1), 0) < valid_b
        cvalid = lax.broadcasted_iota(jnp.int32, (1, b_pad), 1) < valid_b
        # padded entries -> -1e30, so exp() underflows cleanly to 0 below.
        logits = jnp.where(rvalid & cvalid, logits, -1e30)

    # Single shared max + single exp pass feeds both row and column LSEs.
    # Safe: cosine-similarity logits are bounded by +/- 1/temperature, so no
    # valid row/column can fully underflow under one global max.
    m = jnp.max(logits)                                      # scalar
    p = jnp.exp(logits - m)                                  # (Bp, Bp), one EUP pass

    row_sums = jnp.sum(p, axis=-1, keepdims=True)            # (Bp, 1)
    # Column sums kept as an exact f32 reduce to preserve 1e-5 parity with the
    # reference; for large B swap in the MXU ones-row matmul:
    #   col_sums = lax.dot_general(jnp.ones((1, Bp), f32), p, (((1,), (0,)), ((), ())), ...)
    col_sums = jnp.sum(p, axis=0, keepdims=True)             # (1, Bp)

    lse_row = jnp.log(jnp.maximum(row_sums, 1e-30)) + m      # (Bp, 1)
    lse_col = jnp.log(jnp.maximum(col_sums, 1e-30)) + m      # (1, Bp)

    if needs_mask:
        lse_row = jnp.where(rvalid, lse_row, 0.0)
        lse_col = jnp.where(cvalid, lse_col, 0.0)
        diag = jnp.where(rvalid, diag, 0.0)

    # (mean_i(lse_row - diag) + mean_j(lse_col - diag)) / 2
    loss = (jnp.sum(lse_row) + jnp.sum(lse_col) - 2.0 * jnp.sum(diag)) / (
        2.0 * valid_b)
    out_ref[0, 0] = loss


def _round_up(x, m):
    return ((x + m - 1) // m) * m


def infonce_loss(image_embeddings, text_embeddings, temperature):
    b, d = image_embeddings.shape
    assert text_embeddings.shape == (b, d)

    # Lane-dense shapes: pad D to a multiple of 128 and B to a multiple of 8.
    # Zero feature-padding is exact (norms and dot products unchanged); padded
    # rows are masked out inside the kernel.
    b_pad = _round_up(b, 8)
    d_pad = _round_up(d, 128)
    img = jnp.pad(image_embeddings, ((0, b_pad - b), (0, d_pad - d)))
    txt = jnp.pad(text_embeddings, ((0, b_pad - b), (0, d_pad - d)))

    kernel = functools.partial(
        _infonce_kernel,
        inv_temperature=1.0 / float(temperature),
        valid_b=b,
    )

    out = pl.pallas_call(
        kernel,
        out_shape=jax.ShapeDtypeStruct((1, 1), jnp.float32),
        in_specs=[
            pl.BlockSpec((b_pad, d_pad), lambda: (0, 0)),
            pl.BlockSpec((b_pad, d_pad), lambda: (0, 0)),
        ],
        out_specs=pl.BlockSpec(memory_space=pltpu.SMEM),
    )(img, txt)
    return out[0, 0]


def _infonce_ref(image_embeddings, text_embeddings, temperature):
    """Pure-JAX reference matching the PyTorch module's forward."""
    img = image_embeddings.astype(jnp.float32)
    txt = text_embeddings.astype(jnp.float32)
    img = img / jnp.maximum(jnp.linalg.norm(img, axis=-1, keepdims=True), 1e-12)
    txt = txt / jnp.maximum(jnp.linalg.norm(txt, axis=-1, keepdims=True), 1e-12)
    logits = img @ txt.T / temperature
    lse_r = jax.scipy.special.logsumexp(logits, axis=-1)
    lse_c = jax.scipy.special.logsumexp(logits, axis=0)
    # Diagonal computed elementwise (mathematically identical to
    # logits[i, i]); keeps the comparison independent of matmul rounding.
    diag = jnp.sum(img * txt, axis=-1) / temperature
    return (jnp.mean(lse_r - diag) + jnp.mean(lse_c - diag)) * 0.5


if __name__ == "__main__":
    key = jax.random.PRNGKey(0)
    k_img, k_txt = jax.random.split(key)
    B, D = 8, 32          # small batch of paired image/text embeddings
    temperature = 0.07

    image_embeddings = jax.random.normal(k_img, (B, D), dtype=jnp.float32)
    text_embeddings = jax.random.normal(k_txt, (B, D), dtype=jnp.float32)

    loss = infonce_loss(image_embeddings, text_embeddings, temperature)
    loss = jax.block_until_ready(loss)

    ref = _infonce_ref(image_embeddings, text_embeddings, temperature)
    assert jnp.allclose(loss, ref, rtol=1e-5, atol=1e-5), (loss, ref)

    print("KERNEL_OK")
</pallas_src>

<mosaic_0001>
module attributes {stable_mosaic.version = 11 : i64} {
  func.func @_infonce_kernel(%arg0: memref<8x128xf32, #tpu.memory_space<vmem>>, %arg1: memref<8x128xf32, #tpu.memory_space<vmem>>, %arg2: memref<1x1xf32, #tpu.memory_space<smem>>) attributes {dimension_semantics = [], scalar_prefetch = 0 : i64, scratch_operands = 0 : i64, tpu.core_type = #tpu.core_type<tc>} {
    %c0 = arith.constant 0 : index
    %c0_0 = arith.constant 0 : index
    %0 = vector.load %arg0[%c0, %c0_0] : memref<8x128xf32, #tpu.memory_space<vmem>>, vector<8x128xf32>
    %c0_1 = arith.constant 0 : index
    %c0_2 = arith.constant 0 : index
    %1 = vector.load %arg1[%c0_1, %c0_2] : memref<8x128xf32, #tpu.memory_space<vmem>>, vector<8x128xf32>
    %2 = arith.mulf %0, %0 : vector<8x128xf32>
    %cst = arith.constant dense<0.000000e+00> : vector<8xf32>
    %3 = vector.multi_reduction <add>, %2, %cst [1] : vector<8x128xf32> to vector<8xf32>
    %4 = vector.shape_cast %3 : vector<8xf32> to vector<8x1xf32>
    %cst_3 = arith.constant 1.000000e-24 : f32
    %5 = vector.broadcast %cst_3 : f32 to vector<8x1xf32>
    %6 = arith.maximumf %4, %5 : vector<8x1xf32>
    %7 = math.rsqrt %6 : vector<8x1xf32>
    %8 = arith.mulf %1, %1 : vector<8x128xf32>
    %cst_4 = arith.constant dense<0.000000e+00> : vector<8xf32>
    %9 = vector.multi_reduction <add>, %8, %cst_4 [1] : vector<8x128xf32> to vector<8xf32>
    %10 = vector.shape_cast %9 : vector<8xf32> to vector<8x1xf32>
    %cst_5 = arith.constant 1.000000e-24 : f32
    %11 = vector.broadcast %cst_5 : f32 to vector<8x1xf32>
    %12 = arith.maximumf %10, %11 : vector<8x1xf32>
    %13 = math.rsqrt %12 : vector<8x1xf32>
    %cst_6 = arith.constant 14.2857141 : f32
    %14 = vector.broadcast %cst_6 : f32 to vector<8x1xf32>
    %15 = arith.mulf %7, %14 : vector<8x1xf32>
    %16 = vector.broadcast %15 : vector<8x1xf32> to vector<8x128xf32>
    %17 = arith.mulf %0, %16 : vector<8x128xf32>
    %18 = vector.broadcast %13 : vector<8x1xf32> to vector<8x128xf32>
    %19 = arith.mulf %1, %18 : vector<8x128xf32>
    %20 = arith.mulf %17, %19 : vector<8x128xf32>
    %cst_7 = arith.constant dense<0.000000e+00> : vector<8xf32>
    %21 = vector.multi_reduction <add>, %20, %cst_7 [1] : vector<8x128xf32> to vector<8xf32>
    %22 = vector.shape_cast %21 : vector<8xf32> to vector<8x1xf32>
    %cst_8 = arith.constant dense<0.000000e+00> : vector<8x8xf32>
    %23 = tpu.matmul %17, %19, %cst_8 {dimension_numbers = #tpu.dot_dimension_numbers<[1], [1], [0], [0], [0, 0, 1, 0], [], []>} : vector<8x128xf32>, vector<8x128xf32>, vector<8x8xf32> -> vector<8x8xf32>
    %24 = vector.shape_cast %23 : vector<8x8xf32> to vector<1x8x8xf32>
    %cst_9 = arith.constant dense<0xFF800000> : vector<1xf32>
    %25 = vector.multi_reduction <maximumf>, %24, %cst_9 [1, 2] : vector<1x8x8xf32> to vector<1xf32>
    %26 = vector.shape_cast %25 : vector<1xf32> to vector<1x1x1xf32>
    %27 = vector.extract %26[0, 0, 0] : f32 from vector<1x1x1xf32>
    %28 = vector.broadcast %27 : f32 to vector<8x8xf32>
    %29 = arith.subf %23, %28 : vector<8x8xf32>
    %30 = math.exp %29 : vector<8x8xf32>
    %cst_10 = arith.constant dense<0.000000e+00> : vector<8xf32>
    %31 = vector.multi_reduction <add>, %30, %cst_10 [1] : vector<8x8xf32> to vector<8xf32>
    %32 = vector.shape_cast %31 : vector<8xf32> to vector<8x1xf32>
    %cst_11 = arith.constant dense<0.000000e+00> : vector<8xf32>
    %33 = vector.multi_reduction <add>, %30, %cst_11 [0] : vector<8x8xf32> to vector<8xf32>
    %34 = vector.shape_cast %33 : vector<8xf32> to vector<1x8xf32>
    %cst_12 = arith.constant 1.000000e-30 : f32
    %35 = vector.broadcast %cst_12 : f32 to vector<8x1xf32>
    %36 = arith.maximumf %32, %35 : vector<8x1xf32>
    %37 = math.log %36 : vector<8x1xf32>
    %38 = vector.broadcast %27 : f32 to vector<8x1xf32>
    %39 = arith.addf %37, %38 : vector<8x1xf32>
    %cst_13 = arith.constant 1.000000e-30 : f32
    %40 = vector.broadcast %cst_13 : f32 to vector<1x8xf32>
    %41 = arith.maximumf %34, %40 : vector<1x8xf32>
    %42 = math.log %41 : vector<1x8xf32>
    %43 = vector.broadcast %27 : f32 to vector<1x8xf32>
    %44 = arith.addf %42, %43 : vector<1x8xf32>
    %45 = vector.shape_cast %39 : vector<8x1xf32> to vector<1x8x1xf32>
    %cst_14 = arith.constant dense<0.000000e+00> : vector<1xf32>
    %46 = vector.multi_reduction <add>, %45, %cst_14 [1, 2] : vector<1x8x1xf32> to vector<1xf32>
    %47 = vector.shape_cast %46 : vector<1xf32> to vector<1x1x1xf32>
    %48 = vector.extract %47[0, 0, 0] : f32 from vector<1x1x1xf32>
    %49 = vector.shape_cast %44 : vector<1x8xf32> to vector<1x1x8xf32>
    %cst_15 = arith.constant dense<0.000000e+00> : vector<1xf32>
    %50 = vector.multi_reduction <add>, %49, %cst_15 [1, 2] : vector<1x1x8xf32> to vector<1xf32>
    %51 = vector.shape_cast %50 : vector<1xf32> to vector<1x1x1xf32>
    %52 = vector.extract %51[0, 0, 0] : f32 from vector<1x1x1xf32>
    %53 = arith.addf %48, %52 : f32
    %54 = vector.shape_cast %22 : vector<8x1xf32> to vector<1x8x1xf32>
    %cst_16 = arith.constant dense<0.000000e+00> : vector<1xf32>
    %55 = vector.multi_reduction <add>, %54, %cst_16 [1, 2] : vector<1x8x1xf32> to vector<1xf32>
    %56 = vector.shape_cast %55 : vector<1xf32> to vector<1x1x1xf32>
    %57 = vector.extract %56[0, 0, 0] : f32 from vector<1x1x1xf32>
    %cst_17 = arith.constant 2.000000e+00 : f32
    %58 = arith.mulf %cst_17, %57 : f32
    %59 = arith.subf %53, %58 : f32
    %cst_18 = arith.constant 1.600000e+01 : f32
    %60 = arith.divf %59, %cst_18 : f32
    %c0_19 = arith.constant 0 : index
    %c0_20 = arith.constant 0 : index
    %61 = memref.load %arg2[%c0_19, %c0_20] : memref<1x1xf32, #tpu.memory_space<smem>>
    memref.store %60, %arg2[%c0_19, %c0_20] : memref<1x1xf32, #tpu.memory_space<smem>>
    return
  }
}

</mosaic_0001>

<llo_original>
// kernel: tpu_custom_call.1
$region0: #{tpu_custom_call.1}
  #allocation0 [shape = 'u32[]', space=smem, size = 0x4, offset = 0x4, fixed_abs, tag = 'smem constant byte address 0x4 - core index']
  #allocation1 [shape = 'u32[72,128]{1,0:T(1,128)}', space=vmem, size = 0x9000, scoped, tag = 'internal scratch']
  %s0 = inlined_call_operand.hbm [shape: f32[8,128], index: 0, kind: input, shape index: {}]
  %s1 = inlined_call_operand.hbm [shape: f32[8,128], index: 1, kind: input, shape index: {}]
  %s2 = inlined_call_operand.hbm [shape: f32[1,1], index: 2, kind: output, shape index: {}]
  %s3 = sld [smem:[#allocation0]]
  $region26: #{tpu_custom_call.1} parent=0
    _
  %s5 = ssub.s32 1, %s3
  %s6 = scalar_select 0, %s5, %s3
  $region1: #{tpu_custom_call.1} parent=0
    #allocation2 [shape = 'u8[4096]{0}', space=vmem, size = 0x1000, scoped, tag = 'input window, operand 0, single buffered']
    #allocation3 [shape = 's32[1]{0}', space=sflag, size = 0x4, scoped, tag = 'scoped memory for tpu_custom_call.1']
    #allocation4 [shape = 's32[1]{0}', space=sflag, size = 0x4, scoped, tag = 'scoped memory for tpu_custom_call.1']
    #allocation5 [shape = 'u8[4096]{0}', space=vmem, size = 0x1000, scoped, tag = 'input window, operand 1, single buffered']
    #allocation6 [shape = 's32[1]{0}', space=sflag, size = 0x4, scoped, tag = 'scoped memory for tpu_custom_call.1']
    #allocation7 [shape = 'u8[512]{0}', space=smem, size = 0x200, scoped, tag = 'output window, operand 0, single buffered']
    %7 = vsyncpa [#allocation3], 0
    %8 = vsyncpa [#allocation6], 0
    %9 = vsyncpa [#allocation4], 0
    // Predicated region
    $region2: #{tpu_custom_call.1} parent=1 // pred_check
      _
    $region3: #{tpu_custom_call.1} parent=1 // pred_check_branch
      %11 = sbr.rel (0) target = $region5
    $region4: #{tpu_custom_call.1} parent=1 // pred_region
      %13 = vsyncadd [#allocation3], 0
      %s15 = sshll.u32 %s0, 4
      %s16 = int_to_ptr.hbm [resolvable:$true] %s15
      %s17 = sshll.u32 [#allocation2], 4
      %s18 = int_to_ptr.vmem [resolvable:$true] %s17
      %20 = dma.hbm_to_vmem [thread:$0]  %s16, 128, %s18, [#allocation3]
    $region5: #{tpu_custom_call.1} parent=1 // pred_fallthru
      _
    // Predicated region
    $region6: #{tpu_custom_call.1} parent=1 // pred_check
      _
    $region7: #{tpu_custom_call.1} parent=1 // pred_check_branch
      %22 = sbr.rel (0) target = $region9
    $region8: #{tpu_custom_call.1} parent=1 // pred_region
      %24 = vsyncadd [#allocation6], 0
      %s26 = sshll.u32 %s1, 4
      %s27 = int_to_ptr.hbm [resolvable:$true] %s26
      %s28 = sshll.u32 [#allocation5], 4
      %s29 = int_to_ptr.vmem [resolvable:$true] %s28
      %31 = dma.hbm_to_vmem [thread:$0]  %s27, 128, %s29, [#allocation6]
    $region9: #{tpu_custom_call.1} parent=1 // pred_fallthru
      _
    // Predicated region
    $region10: #{tpu_custom_call.1} parent=1 // pred_check
      _
    $region11: #{tpu_custom_call.1} parent=1 // pred_check_branch
      %33 = sbr.rel (0) target = $region13
    $region12: #{tpu_custom_call.1} parent=1 // pred_region
      %35 = dma.done [#allocation3], 128
    $region13: #{tpu_custom_call.1} parent=1 // pred_fallthru
      _
    // Predicated region
    $region14: #{tpu_custom_call.1} parent=1 // pred_check
      _
    $region15: #{tpu_custom_call.1} parent=1 // pred_check_branch
      %37 = sbr.rel (0) target = $region17
    $region16: #{tpu_custom_call.1} parent=1 // pred_region
      %39 = dma.done [#allocation6], 128
    $region17: #{tpu_custom_call.1} parent=1 // pred_fallthru
      _
    %v40 = vld [vmem:[#allocation2] sm:$0xff]
    %v41 = vld [vmem:[#allocation5] sm:$0xff]
    %v42 = vmul.f32 %v40, %v40
    %43 = vadd.xlane.f32.xlu0 %v42
    %v44 = vpop.xlane.xlu0 %43
    %v45 = vmax.f32 %v44, 1e-24
    %v46 = vrsqrt.pop %v45
    %v47 = vmul.f32 %v46, %v45
    %v48 = vmul.f32 %v47, %v46
    %v49 = vmul.f32 0.5, %v48
    %v50 = vsub.f32 1.5, %v49
    %v51 = vmul.f32 %v46, %v50
    %vm52 = vweird.f32 %v45
    %vm53 = vweird.f32 %v46
    %vm54 = vmor %vm52, %vm53
    %v55 = vsel %vm54, %v46, %v51
    %v56 = vmul.f32 %v41, %v41
    %57 = vadd.xlane.f32.xlu0 %v56
    %v58 = vpop.xlane.xlu0 %57
    %v59 = vmax.f32 %v58, 1e-24
    %v60 = vrsqrt.pop %v59
    %v61 = vmul.f32 %v60, %v59
    %v62 = vmul.f32 %v61, %v60
    %v63 = vmul.f32 0.5, %v62
    %v64 = vsub.f32 1.5, %v63
    %v65 = vmul.f32 %v60, %v64
    %vm66 = vweird.f32 %v59
    %vm67 = vweird.f32 %v60
    %vm68 = vmor %vm66, %vm67
    %v69 = vsel %vm68, %v60, %v65
    %v70 = vmul.f32 %v55, 14.285714
    %v71 = vmul.f32 %v40, %v70
    %v72 = vmul.f32 %v41, %v69
    %v73 = vmul.f32 %v71, %v72
    %74 = vadd.xlane.f32.xlu0 %v73
    %v75 = vpop.xlane.xlu0 %74
    %76 = vmatpush.xpose.msra.mxu0 0.0
    %77 = vmatpush.xpose.msra.mxu0 0.0
    %78 = vmatpush.xpose.msra.mxu0 0.0
    %79 = vmatpush.xpose.msra.mxu0 0.0
    %80 = vmatpush.xpose.msra.mxu0 0.0
    %81 = vmatpush.xpose.msra.mxu0 0.0
    %82 = vmatpush.xpose.msra.mxu0 0.0
    %83 = vmatpush.xpose.msra.mxu0 0.0
    %84 = vmatpush.xpose.msra.mxu0 0.0
    %85 = vmatpush.xpose.msra.mxu0 0.0
    %86 = vmatpush.xpose.msra.mxu0 0.0
    %87 = vmatpush.xpose.msra.mxu0 0.0
    %88 = vmatpush.xpose.msra.mxu0 0.0
    %89 = vmatpush.xpose.msra.mxu0 0.0
    %90 = vmatpush.xpose.msra.mxu0 0.0
    %91 = vmatpush.xpose.msra.mxu0 %v72
    %92 = vmatmul.f32.gmra.mxu0 %v71
    %v93 = vpop.f32.mrf.mxu0
    %v94 = vadd.f32 0.0, %v93
    %95 = vdwg.mxu0
    %vm96 = vcmask 64512
    %v97 = vsel %vm96, %v94, -inf
    %98 = vmax.xlane.f32.xlu0 %v97
    %v99 = vpop.xlane.xlu0 %98
    %v100 = vrot.slane %v99, 4
    %v101 = vmax.f32 %v99, %v100
    %v102 = vrot.slane %v101, 2
    %v103 = vmax.f32 %v101, %v102
    %v104 = vrot.slane %v103, 1
    %v105 = vmax.f32 %v103, %v104
    %s106 = vtos %v105
    %v107 = vstv %s106
    %v108 = vsub.f32 %v94, %v107
    %v109 = vmul.f32 %v108, 1.442695
    %v110 = vpow.pop %v109
    %v111 = vsel %vm96, %v110, 0.0
    %112 = vadd.xlane.f32.xlu0 %v111
    %v113 = vpop.xlane.xlu0 %112
    %v114 = vrot.slane %v111, 4
    %v115 = vadd.f32 %v111, %v114
    %v116 = vrot.slane %v115, 2
    %v117 = vadd.f32 %v115, %v116
    %v118 = vrot.slane %v117, 1
    %v119 = vadd.f32 %v117, %v118
    %v120 = vmax.f32 %v113, 1e-30
    %v121 = vlog2.pop %v120
    %v122 = vmul.f32 %v121, 0.6931472
    %v123 = vadd.f32 %v122, %v107
    %v124 = vmax.f32 %v119, 1e-30
    %v125 = vlog2.pop %v124
    %v126 = vmul.f32 %v125, 0.6931472
    %v127 = vadd.f32 %v126, %v107
    %vm128 = vcmask 7168
    %v129 = vsel %vm128, %v123, 0.0
    %130 = vadd.xlane.f32.xlu0 %v129
    %v131 = vpop.xlane.xlu0 %130
    %v132 = vrot.slane %v131, 4
    %v133 = vadd.f32 %v131, %v132
    %v134 = vrot.slane %v133, 2
    %v135 = vadd.f32 %v133, %v134
    %v136 = vrot.slane %v135, 1
    %v137 = vadd.f32 %v135, %v136
    %s138 = vtos %v137
    %vm139 = vcmask 57344
    %v140 = vsel %vm139, %v127, 0.0
    %141 = vadd.xlane.f32.xlu0 %v140
    %v142 = vpop.xlane.xlu0 %141
    %v143 = vrot.slane %v142, 4
    %v144 = vadd.f32 %v142, %v143
    %v145 = vrot.slane %v144, 2
    %v146 = vadd.f32 %v144, %v145
    %v147 = vrot.slane %v146, 1
    %v148 = vadd.f32 %v146, %v147
    %s149 = vtos %v148
    %s150 = sadd.f32 %s138, %s149
    %v151 = vsel %vm128, %v75, 0.0
    %152 = vadd.xlane.f32.xlu0 %v151
    %v153 = vpop.xlane.xlu0 %152
    %v154 = vrot.slane %v153, 4
    %v155 = vadd.f32 %v153, %v154
    %v156 = vrot.slane %v155, 2
    %v157 = vadd.f32 %v155, %v156
    %v158 = vrot.slane %v157, 1
    %v159 = vadd.f32 %v157, %v158
    %s160 = vtos %v159
    %s161 = smul.f32 %s160, 2.0
    %s162 = ssub.f32 %s150, %s161
    %v163 = vrcp.pop 16.0
    %v164 = vmul.f32 16.0, %v163
    %v165 = vsub.f32 1.0, %v164
    %v166 = vmul.f32 %v163, %v165
    %v167 = vadd.f32 %v163, %v166
    %vm168 = vweird.f32 %v163
    %v169 = vsel %vm168, %v163, %v167
    %s170 = vtos %v169
    %s171 = smul.f32 %s162, %s170
    %s172 = scalar_lea.smem [#allocation7], 0
    %173 = sst [smem:[%s172]] %s171
    // Predicated region
    $region18: #{tpu_custom_call.1} parent=1 // pred_check
      _
    $region19: #{tpu_custom_call.1} parent=1 // pred_check_branch
      %175 = sbr.rel (0) target = $region21
    $region20: #{tpu_custom_call.1} parent=1 // pred_region
      %177 = vsyncadd [#allocation4], 0
      %s179 = sshll.u32 %s2, 4
      %s180 = int_to_ptr.hbm [resolvable:$true] %s179
      %182 = dma.smem_to_hbm [#allocation7], 16, %s180, [#allocation4]
    $region21: #{tpu_custom_call.1} parent=1 // pred_fallthru
      _
    // Predicated region
    $region22: #{tpu_custom_call.1} parent=1 // pred_check
      _
    $region23: #{tpu_custom_call.1} parent=1 // pred_check_branch
      %184 = sbr.rel (0) target = $region25
    $region24: #{tpu_custom_call.1} parent=1 // pred_region
      %186 = dma.done [#allocation4], 16
    $region25: #{tpu_custom_call.1} parent=1 // pred_fallthru
      _
    %187 = sfence
    %188 = vsyncpa [#allocation3], 1
    %189 = vsyncpa [#allocation6], 1
    %190 = vsyncpa [#allocation4], 1

</llo_original>
